<compile_context>
chip_gen: v6e
topology: v6e:2x2x1
jax: 0.10.0
libtpu: 0.0.40
codegen_flags: <defaults>
</compile_context>

<pallas_src>
import math

import jax
import jax.numpy as jnp
from jax.experimental import pallas as pl
from jax.experimental.pallas import tpu as pltpu

_SMEM_SPEC = pl.BlockSpec(memory_space=pltpu.MemorySpace.SMEM)

_TM_PREF = 256        # batch tile
_TN_PREF = 512        # class tile (bigger tiles amortize per-step overhead/exp epilogue)
_ROW_TILE_PREF = 256  # W-normalization row tile


def _vmem_limit_bytes():
    """Per-generation scoped-VMEM budget (v7x only has 64 MiB physical)."""
    cap = 128 * 1024 * 1024
    try:
        cap = int(pltpu.get_tpu_info().vmem_capacity_bytes)
    except Exception:
        pass
    return min(64 * 1024 * 1024, max(32 * 1024 * 1024, cap // 2))


def _pick_tile(dim, preferred, align):
    """Largest power-of-two tile <= preferred that divides `dim` and is a
    multiple of `align`; falls back to the full (unblocked) dimension."""
    t = preferred
    while t >= align:
        if dim % t == 0:
            return t
        t //= 2
    return dim


def _shrink_tiles(tm, tn, b, c, d, budget):
    """Keep the fused pass-1 working set inside the VMEM budget (operand
    blocks scale with D because there is no K-tiling yet)."""
    def est(tm_, tn_):
        return (2 * tm_ * d * 4      # raw x block (f32, double-buffered)
                + 2 * tn_ * d * 2    # wn block (bf16, double-buffered)
                + 2 * tm_ * d * 2    # xn output block (bf16, double-buffered)
                + 4 * tm_ * tn_ * 4  # in-kernel logits / exp intermediates
                + 256 * 1024)        # small blocks + headroom
    while est(tm, tn) > budget:
        if tn > 256 and c % (tn // 2) == 0:
            tn //= 2
        elif tm > 32 and b % (tm // 2) == 0:
            tm //= 2
        elif tn > 128 and c % (tn // 2) == 0:
            tn //= 2
        else:
            break
    return tm, tn


# ---------------------------------------------------------------------------
# 0) row normalization of W (F.normalize, eps=1e-12), emitted in compute dtype
# ---------------------------------------------------------------------------
def _normalize_rows_kernel(w_ref, o_ref):
    w = w_ref[...].astype(jnp.float32)
    ssq = jnp.sum(w * w, axis=-1, keepdims=True)
    # max(||w||, 1e-12) == sqrt(max(ssq, 1e-24)); rsqrt runs on the EUP slot.
    inv = jax.lax.rsqrt(jnp.maximum(ssq, 1e-24))
    o_ref[...] = (w * inv).astype(o_ref.dtype)


def _normalize_rows(w, out_dtype, vmem_limit):
    n, d = w.shape
    tr = _pick_tile(n, _ROW_TILE_PREF, 16)
    return pl.pallas_call(
        _normalize_rows_kernel,
        out_shape=jax.ShapeDtypeStruct((n, d), out_dtype),
        grid=(n // tr,),
        in_specs=[pl.BlockSpec((tr, d), lambda i: (i, 0))],
        out_specs=pl.BlockSpec((tr, d), lambda i: (i, 0)),
        compiler_params=pltpu.CompilerParams(
            dimension_semantics=("parallel",),
            vmem_limit_bytes=vmem_limit),
    )(w)


# ---------------------------------------------------------------------------
# 1a) inference path: cosine logits only (x-normalization fused per tile)
# ---------------------------------------------------------------------------
def _logits_kernel(x_ref, wn_ref, out_ref):
    x = x_ref[...].astype(jnp.float32)
    ssq = jnp.sum(x * x, axis=-1, keepdims=True)
    xn = (x * jax.lax.rsqrt(jnp.maximum(ssq, 1e-24))).astype(wn_ref.dtype)
    out_ref[...] = jax.lax.dot_general(
        xn, wn_ref[...],
        dimension_numbers=(((1,), (1,)), ((), ())),   # contract D of both
        preferred_element_type=jnp.float32).astype(out_ref.dtype)


# ---------------------------------------------------------------------------
# 1b) training pass 1: fused x-normalization + cosine matmul + AdaCos stats
#     (no (B,C) logits ever leave VMEM)
# ---------------------------------------------------------------------------
def _stats_kernel(x_ref, wn_ref, lab_ref, s_ref, xn_ref, bsum_ref, cost_ref):
    j = pl.program_id(1)

    @pl.when(j == 0)
    def _():
        x = x_ref[...].astype(jnp.float32)
        ssq = jnp.sum(x * x, axis=-1, keepdims=True)
        xn_ref[...] = (x * jax.lax.rsqrt(jnp.maximum(ssq, 1e-24))
                       ).astype(xn_ref.dtype)
        bsum_ref[...] = jnp.zeros(bsum_ref.shape, bsum_ref.dtype)
        cost_ref[...] = jnp.zeros(cost_ref.shape, cost_ref.dtype)

    logits = jax.lax.dot_general(
        xn_ref[...], wn_ref[...],
        dimension_numbers=(((1,), (1,)), ((), ())),
        preferred_element_type=jnp.float32)

    tm, tn = logits.shape
    col = jax.lax.broadcasted_iota(jnp.int32, (tm, tn), 1)
    is_target = col == (lab_ref[...] - j * tn)        # (tm,tn) vs (tm,1)
    s_old = s_ref[0]

    # B_avg numerator: exp(s_old * raw logits) at non-target positions.
    bsum_ref[...] += jnp.sum(
        jnp.where(is_target, 0.0, jnp.exp(s_old * logits)),
        axis=-1, keepdims=True)
    # target cosine (clamped like the reference) for the theta median.
    clamped = jnp.clip(logits, -1.0 + 1e-7, 1.0 - 1e-7)
    cost_ref[...] += jnp.sum(jnp.where(is_target, clamped, 0.0),
                             axis=-1, keepdims=True)


# ---------------------------------------------------------------------------
# 2) training pass 2: recompute logits + online-LSE cross-entropy + top-1
# ---------------------------------------------------------------------------
def _ce_pred_kernel(xn_ref, wn_ref, lab_ref, s_ref, loss_ref, pred_ref,
                    m_sc, l_sc, t_sc, amax_sc, aidx_sc):
    j = pl.program_id(1)

    @pl.when(j == 0)
    def _():
        m_sc[...] = jnp.full(m_sc.shape, -jnp.inf, m_sc.dtype)
        l_sc[...] = jnp.zeros(l_sc.shape, l_sc.dtype)
        t_sc[...] = jnp.zeros(t_sc.shape, t_sc.dtype)
        amax_sc[...] = jnp.full(amax_sc.shape, -jnp.inf, amax_sc.dtype)
        aidx_sc[...] = jnp.zeros(aidx_sc.shape, aidx_sc.dtype)

    logits = jax.lax.dot_general(
        xn_ref[...], wn_ref[...],
        dimension_numbers=(((1,), (1,)), ((), ())),
        preferred_element_type=jnp.float32)
    s_new = s_ref[0]
    out = s_new * logits

    tm, tn = out.shape
    col = jax.lax.broadcasted_iota(jnp.int32, (tm, tn), 1)
    is_target = col == (lab_ref[...] - j * tn)

    # one shared max-reduction feeds both the LSE update and the argmax
    tile_max = jnp.max(out, axis=-1, keepdims=True)

    # running top-1 on the scaled logits (first occurrence wins, like torch)
    tile_aidx = jnp.min(
        jnp.where(out == tile_max, col, jnp.int32(2 ** 30)),
        axis=-1, keepdims=True) + j * tn
    better = tile_max > amax_sc[...]
    aidx_sc[...] = jnp.where(better, tile_aidx, aidx_sc[...])
    amax_sc[...] = jnp.maximum(amax_sc[...], tile_max)

    # online log-sum-exp across class tiles
    m_new = jnp.maximum(m_sc[...], tile_max)
    l_sc[...] = l_sc[...] * jnp.exp(m_sc[...] - m_new) + jnp.sum(
        jnp.exp(out - m_new), axis=-1, keepdims=True)
    m_sc[...] = m_new
    t_sc[...] += jnp.sum(jnp.where(is_target, out, 0.0),
                         axis=-1, keepdims=True)

    @pl.when(j == pl.num_programs(1) - 1)
    def _():
        loss_ref[...] = m_sc[...] + jnp.log(l_sc[...]) - t_sc[...]
        pred_ref[...] = aidx_sc[...]


# ---------------------------------------------------------------------------
# forward wrapper (mirrors ADASoftmax.forward)
# ---------------------------------------------------------------------------
def ada_softmax_forward(x, W, label=None, s=None, *,
                        compute_dtype=jnp.bfloat16,
                        logits_dtype=jnp.float32):
    """Returns cosine logits if label is None, else (loss, prec1, s_new).

    compute_dtype=jnp.float32 can be passed for bit-closer fidelity to the
    f32 PyTorch reference (slower MXU path)."""
    B, D = x.shape
    C = W.shape[0]
    vmem_limit = _vmem_limit_bytes()

    tm = _pick_tile(B, _TM_PREF, 16)
    tn = _pick_tile(C, _TN_PREF, 128)
    tm, tn = _shrink_tiles(tm, tn, B, C, D, budget=(vmem_limit * 3) // 4)

    # normalized W in compute dtype, hoisted out of the (batch, class) grid
    wn = _normalize_rows(W, compute_dtype, vmem_limit)

    params_par = pltpu.CompilerParams(
        dimension_semantics=("parallel", "parallel"),
        vmem_limit_bytes=vmem_limit)
    params_red = pltpu.CompilerParams(
        dimension_semantics=("parallel", "arbitrary"),
        vmem_limit_bytes=vmem_limit)

    if label is None:
        return pl.pallas_call(
            _logits_kernel,
            out_shape=jax.ShapeDtypeStruct((B, C), logits_dtype),
            grid=(B // tm, C // tn),
            in_specs=[pl.BlockSpec((tm, D), lambda i, j: (i, 0)),
                      pl.BlockSpec((tn, D), lambda i, j: (j, 0))],
            out_specs=pl.BlockSpec((tm, tn), lambda i, j: (i, j)),
            compiler_params=params_par,
        )(x, wn)

    lab2d = label.astype(jnp.int32).reshape(B, 1)
    s_old = jnp.asarray([s], dtype=jnp.float32)

    # ---- pass 1: normalized x (reused by pass 2) + AdaCos statistics -------
    xn, bsum_rows, cos_t = pl.pallas_call(
        _stats_kernel,
        out_shape=(jax.ShapeDtypeStruct((B, D), compute_dtype),
                   jax.ShapeDtypeStruct((B, 1), jnp.float32),
                   jax.ShapeDtypeStruct((B, 1), jnp.float32)),
        grid=(B // tm, C // tn),
        in_specs=[pl.BlockSpec((tm, D), lambda i, j: (i, 0)),
                  pl.BlockSpec((tn, D), lambda i, j: (j, 0)),
                  pl.BlockSpec((tm, 1), lambda i, j: (i, 0)),
                  _SMEM_SPEC],
        out_specs=(pl.BlockSpec((tm, D), lambda i, j: (i, 0)),
                   pl.BlockSpec((tm, 1), lambda i, j: (i, 0)),
                   pl.BlockSpec((tm, 1), lambda i, j: (i, 0))),
        compiler_params=params_red,
    )(x, wn, lab2d, s_old)

    # ---- torch.no_grad() adaptive scale update: scalar glue on B values ----
    B_avg = jnp.sum(bsum_rows) / B
    theta_t = jnp.arccos(cos_t[:, 0])                 # theta at target positions
    theta_med = jnp.sort(theta_t)[(B - 1) // 2]       # torch.median: lower median
    s_new = jnp.log(B_avg) / jnp.cos(
        jnp.minimum(jnp.float32(math.pi / 4.0), theta_med))

    # ---- pass 2: cross-entropy of s_new*logits (recomputed) + top-1 --------
    loss_rows, pred = pl.pallas_call(
        _ce_pred_kernel,
        out_shape=(jax.ShapeDtypeStruct((B, 1), jnp.float32),
                   jax.ShapeDtypeStruct((B, 1), jnp.int32)),
        grid=(B // tm, C // tn),
        in_specs=[pl.BlockSpec((tm, D), lambda i, j: (i, 0)),
                  pl.BlockSpec((tn, D), lambda i, j: (j, 0)),
                  pl.BlockSpec((tm, 1), lambda i, j: (i, 0)),
                  _SMEM_SPEC],
        out_specs=(pl.BlockSpec((tm, 1), lambda i, j: (i, 0)),
                   pl.BlockSpec((tm, 1), lambda i, j: (i, 0))),
        scratch_shapes=[pltpu.VMEM((tm, 1), jnp.float32),   # running max
                        pltpu.VMEM((tm, 1), jnp.float32),   # running sum
                        pltpu.VMEM((tm, 1), jnp.float32),   # target logit
                        pltpu.VMEM((tm, 1), jnp.float32),   # running argmax val
                        pltpu.VMEM((tm, 1), jnp.int32)],    # running argmax idx
        compiler_params=params_red,
    )(xn, wn, lab2d, s_new.reshape(1))

    loss = jnp.mean(loss_rows)                        # CrossEntropyLoss 'mean'
    # TODO(synk): accuracy() is undefined in the reference module; standard
    # top-1 accuracy on the scaled logits is assumed (top-5 omitted).
    prec1 = jnp.mean((pred[:, 0] == lab2d[:, 0]).astype(jnp.float32)) * 100.0
    return loss, prec1, s_new


if __name__ == "__main__":
    B, in_feats, n_classes = 16, 64, 512
    key = jax.random.PRNGKey(0)
    kx, kw, kl = jax.random.split(key, 3)

    x = jax.random.normal(kx, (B, in_feats), dtype=jnp.float32)
    # nn.init.xavier_uniform_ for W of shape (n_classes, in_feats):
    # U(-b, b) with b = sqrt(6 / (fan_in + fan_out))
    bound = math.sqrt(6.0 / (in_feats + n_classes))
    W = jax.random.uniform(kw, (n_classes, in_feats), dtype=jnp.float32,
                           minval=-bound, maxval=bound)
    label = jax.random.randint(kl, (B,), 0, n_classes, dtype=jnp.int32)
    s0 = math.sqrt(2.0) * math.log(n_classes - 1)     # initial self.s

    # inference path (label=None) -> cosine logits
    logits = ada_softmax_forward(x, W)
    # training path -> (loss, prec1) plus updated scale s_new
    loss, prec1, s_new = ada_softmax_forward(x, W, label=label, s=s0)

    jax.block_until_ready((logits, loss, prec1, s_new))
    print("KERNEL_OK")
</pallas_src>

<mosaic_0001>
module attributes {stable_mosaic.version = 11 : i64} {
  func.func @_normalize_rows_kernel(%arg0: i32, %arg1: memref<256x64xf32, #tpu.memory_space<vmem>>, %arg2: memref<256x64xbf16, #tpu.memory_space<vmem>>) attributes {dimension_semantics = [#tpu.dimension_semantics<parallel>], iteration_bounds = array<i64: 2>, scalar_prefetch = 0 : i64, scratch_operands = 0 : i64, tpu.core_type = #tpu.core_type<tc>, window_params = [{transform_indices = @transform_0, window_bounds = array<i64: 256, 64>}, {transform_indices = @transform_1, window_bounds = array<i64: 256, 64>}]} {
    %c0 = arith.constant 0 : index
    %c0_0 = arith.constant 0 : index
    %0 = vector.load %arg1[%c0, %c0_0] : memref<256x64xf32, #tpu.memory_space<vmem>>, vector<256x64xf32>
    %1 = arith.mulf %0, %0 : vector<256x64xf32>
    %cst = arith.constant dense<0.000000e+00> : vector<256xf32>
    %2 = vector.multi_reduction <add>, %1, %cst [1] : vector<256x64xf32> to vector<256xf32>
    %3 = vector.shape_cast %2 : vector<256xf32> to vector<256x1xf32>
    %cst_1 = arith.constant 1.000000e-24 : f32
    %4 = vector.broadcast %cst_1 : f32 to vector<256x1xf32>
    %5 = arith.maximumf %3, %4 : vector<256x1xf32>
    %6 = math.rsqrt %5 : vector<256x1xf32>
    %7 = vector.broadcast %6 : vector<256x1xf32> to vector<256x64xf32>
    %8 = arith.mulf %0, %7 : vector<256x64xf32>
    %9 = arith.truncf %8 : vector<256x64xf32> to vector<256x64xbf16>
    %c0_2 = arith.constant 0 : index
    %c0_3 = arith.constant 0 : index
    %10 = vector.load %arg2[%c0_2, %c0_3] : memref<256x64xbf16, #tpu.memory_space<vmem>>, vector<256x64xbf16>
    tpu.vector_store %arg2[%c0_2, %c0_3], %9 {strides = array<i32>} : memref<256x64xbf16, #tpu.memory_space<vmem>>, vector<256x64xbf16>,
    return
  }
  func.func @transform_0(%arg0: i32) -> (i32, i32) {
    %c0_i32 = arith.constant 0 : i32
    %c0_i32_0 = arith.constant 0 : i32
    return %arg0, %c0_i32 : i32, i32
  }
  func.func @transform_1(%arg0: i32) -> (i32, i32) {
    %c0_i32 = arith.constant 0 : i32
    %c0_i32_0 = arith.constant 0 : i32
    return %arg0, %c0_i32 : i32, i32
  }
}

</mosaic_0001>

<llo_original>
// kernel: tpu_custom_call.1
$region0: #{tpu_custom_call.1}
  #allocation0 [shape = 'u32[]', space=smem, size = 0x4, offset = 0x4, fixed_abs, tag = 'smem constant byte address 0x4 - core index']
  #allocation1 [shape = 'u32[144,128]{1,0:T(1,128)}', space=vmem, size = 0x12000, scoped, tag = 'internal scratch']
  %s0 = inlined_call_operand.vmem [shape: f32[512,64], index: 0, kind: input, shape index: {}]
  %s1 = inlined_call_operand.vmem [shape: bf16[512,64], index: 1, kind: output, shape index: {}]
  %s2 = sld [smem:[#allocation0]]
  $region37: #{tpu_custom_call.1} parent=0
    _
  %s4 = ssub.s32 1, %s2
  %s5 = scalar_select 0, %s4, %s2
  loop: start=0, step=1, limit=4
  $region2: #{tpu_custom_call.1} parent=0 // loop_pre_header
    _
  $region3: #{tpu_custom_call.1} parent=0 // loop_header
    %s7 = sphi 0, %s11
    %p8 = scmp.ge.s32.totalorder %s7, 4
    %s17 = sphi 0, %s19
    %s20 = sphi 0, %s17
    %s21 = sphi 0, %s20
    %s37 = sphi 0, %s21
    %s43 = sphi 0, %s45
    %s46 = sphi 0, %s43
    %s47 = sphi 0, %s46
    %s63 = sphi 0, %s47
  $region4: #{tpu_custom_call.1} parent=0 // loop_header_branch
    %10 = sbr.rel (%p8) target = $region8
  $region5: #{tpu_custom_call.1} parent=0 // loop_body
    %s12 = ssub.s32 %s7, 1
    %s13 = ssub.s32 %s7, 2
    %s14 = sadd.s32 %s7, 1
    %s15 = ssub.s32 %s7, %s14
    %p16 = scmp.eq.s32.totalorder %s15, 0
    %s18 = sadd.s32 %s17, 1
    %s19 = scalar_select %p16, %s17, %s18
    %p22 = pneg %p16
    %p23 = scmp.eq.s32.totalorder %s7, 1
    %p24 = por %p22, %p23
    %p25 = scmp.ne.s32.totalorder %s17, %s20
    %p26 = scmp.eq.s32.totalorder %s7, 0
    %p27 = por %p25, %p26
    %p28 = scmp.ne.s32.totalorder %s17, %s20
    %p29 = scmp.eq.s32.totalorder %s12, 1
    %p30 = por %p28, %p29
    %p31 = scmp.ne.s32.totalorder %s20, %s21
    %p32 = scmp.eq.s32.totalorder %s12, 0
    %p33 = por %p31, %p32
    %p34 = scmp.ne.s32.totalorder %s20, %s21
    %p35 = scmp.eq.s32.totalorder %s13, 1
    %p36 = por %p34, %p35
    %p38 = scmp.ne.s32.totalorder %s21, %s37
    %p39 = scmp.eq.s32.totalorder %s13, 0
    %p40 = por %p38, %p39
    %s41 = ssub.s32 %s7, %s14
    %p42 = scmp.eq.s32.totalorder %s41, 0
    %s44 = sadd.s32 %s43, 1
    %s45 = scalar_select %p42, %s43, %s44
    %p48 = pneg %p42
    %p49 = scmp.eq.s32.totalorder %s7, 1
    %p50 = por %p48, %p49
    %p51 = scmp.ne.s32.totalorder %s43, %s46
    %p52 = scmp.eq.s32.totalorder %s7, 0
    %p53 = por %p51, %p52
    %p54 = scmp.ne.s32.totalorder %s43, %s46
    %p55 = scmp.eq.s32.totalorder %s12, 1
    %p56 = por %p54, %p55
    %p57 = scmp.ne.s32.totalorder %s46, %s47
    %p58 = scmp.eq.s32.totalorder %s12, 0
    %p59 = por %p57, %p58
    %p60 = scmp.ne.s32.totalorder %s46, %s47
    %p61 = scmp.eq.s32.totalorder %s13, 1
    %p62 = por %p60, %p61
    %p64 = scmp.ne.s32.totalorder %s47, %s63
    %p65 = scmp.eq.s32.totalorder %s13, 0
    %p66 = por %p64, %p65
    %p67 = scmp.le.s32.totalorder 1, %s7
    %p68 = scmp.lt.s32.totalorder %s7, 3
    %p69 = pnand %p67, %p68
    %p70 = pneg %p69
    // Predicated region
    $region9: #{tpu_custom_call.1} parent=5 // pred_check
      _
    $region10: #{tpu_custom_call.1} parent=5 // pred_check_branch
      %72 = sbr.rel (%p69) target = $region12
    $region11: #{tpu_custom_call.1} parent=5 // pred_region
      %s73 = ssub.s32 %s7, 1
    $region12: #{tpu_custom_call.1} parent=5 // pred_fallthru
      _
    %p74 = scmp.lt.s32.totalorder %s7, 2
    // Predicated region
    $region13: #{tpu_custom_call.1} parent=5 // pred_check
      %p75 = pneg %p74
    $region14: #{tpu_custom_call.1} parent=5 // pred_check_branch
      %77 = sbr.rel (%p75) target = $region16
    $region15: #{tpu_custom_call.1} parent=5 // pred_region
      // Predicated region
      $region17: #{tpu_custom_call.1} parent=15 // pred_check
        %p78 = pneg %p27
      $region18: #{tpu_custom_call.1} parent=15 // pred_check_branch
        %80 = sbr.rel (%p78) target = $region20
      $region19: #{tpu_custom_call.1} parent=15 // pred_region
        %s81 = smul.u32 32, %s7
        %p82 = scmp.lt.s32.totalorder %s81, 63
        %s83 = scalar_select %p82, %s81, 63
        %s84 = smul.addr %s83, 8
        %s85 = scalar_lea.vmem %s0, %s84
        %s86 = smul.u32 32, %s7
      $region20: #{tpu_custom_call.1} parent=15 // pred_fallthru
        _
    $region16: #{tpu_custom_call.1} parent=5 // pred_fallthru
      _
    %p87 = scmp.le.s32.totalorder 1, %s7
    %p88 = scmp.lt.s32.totalorder %s7, 3
    %p89 = pnand %p87, %p88
    %p90 = pneg %p89
    // Predicated region
    $region21: #{tpu_custom_call.1} parent=5 // pred_check
      _
    $region22: #{tpu_custom_call.1} parent=5 // pred_check_branch
      %92 = sbr.rel (%p89) target = $region24
    $region23: #{tpu_custom_call.1} parent=5 // pred_region
      %s93 = ssub.s32 %s7, 1
      %s94 = smul.u32 32, %s12
      %p95 = scmp.lt.s32.totalorder %s94, 63
      %s96 = scalar_select %p95, %s94, 63
      %s97 = smul.addr %s96, 8
      %s98 = scalar_lea.vmem %s0, %s97
      %p99 = pneg %p33
      %p100 = pneg %p30
      %p101 = pneg %p59
      %p102 = pneg %p56
      %s103 = smul.u32 32, %s12
      %p104 = scmp.lt.s32.totalorder %s103, 63
      %s105 = scalar_select %p104, %s103, 63
      %s106 = smul.addr %s105, 4
      %s107 = scalar_lea.vmem %s1, %s106
      %s108 = smul.u32 32, %s12
      %p109 = scmp.lt.s32.totalorder %s108, 63
      %s110 = scalar_select %p109, %s108, 63
      %s111 = smul.addr %s110, 8
      %s112 = scalar_lea.vmem %s0, %s111
      %s113 = smul.u32 32, %s12
      %s114 = smul.u32 32, %s12
      %p115 = scmp.lt.s32.totalorder %s114, 63
      %s116 = scalar_select %p115, %s114, 63
      %s117 = smul.addr %s116, 4
      %s118 = scalar_lea.vmem %s1, %s117
      %s119 = smul.u32 32, %s12
      %v120 = vld [vmem:[%s112] sm:$0xff]
      %v121 = vld [vmem:[%s112 + $0x8] sm:$0xff]
      %v122 = vld [vmem:[%s112 + $0x10] sm:$0xff]
      %v123 = vld [vmem:[%s112 + $0x18] sm:$0xff]
      %v124 = vld [vmem:[%s112 + $0x20] sm:$0xff]
      %v125 = vld [vmem:[%s112 + $0x28] sm:$0xff]
      %v126 = vld [vmem:[%s112 + $0x30] sm:$0xff]
      %v127 = vld [vmem:[%s112 + $0x38] sm:$0xff]
      %v128 = vld [vmem:[%s112 + $0x40] sm:$0xff]
      %v129 = vld [vmem:[%s112 + $0x48] sm:$0xff]
      %v130 = vld [vmem:[%s112 + $0x50] sm:$0xff]
      %v131 = vld [vmem:[%s112 + $0x58] sm:$0xff]
      %v132 = vld [vmem:[%s112 + $0x60] sm:$0xff]
      %v133 = vld [vmem:[%s112 + $0x68] sm:$0xff]
      %v134 = vld [vmem:[%s112 + $0x70] sm:$0xff]
      %v135 = vld [vmem:[%s112 + $0x78] sm:$0xff]
      %v136 = vld [vmem:[%s112 + $0x80] sm:$0xff]
      %v137 = vld [vmem:[%s112 + $0x88] sm:$0xff]
      %v138 = vld [vmem:[%s112 + $0x90] sm:$0xff]
      %v139 = vld [vmem:[%s112 + $0x98] sm:$0xff]
      %v140 = vld [vmem:[%s112 + $0xa0] sm:$0xff]
      %v141 = vld [vmem:[%s112 + $0xa8] sm:$0xff]
      %v142 = vld [vmem:[%s112 + $0xb0] sm:$0xff]
      %v143 = vld [vmem:[%s112 + $0xb8] sm:$0xff]
      %v144 = vld [vmem:[%s112 + $0xc0] sm:$0xff]
      %v145 = vld [vmem:[%s112 + $0xc8] sm:$0xff]
      %v146 = vld [vmem:[%s112 + $0xd0] sm:$0xff]
      %v147 = vld [vmem:[%s112 + $0xd8] sm:$0xff]
      %v148 = vld [vmem:[%s112 + $0xe0] sm:$0xff]
      %v149 = vld [vmem:[%s112 + $0xe8] sm:$0xff]
      %v150 = vld [vmem:[%s112 + $0xf0] sm:$0xff]
      %v151 = vld [vmem:[%s112 + $0xf8] sm:$0xff]
      %v152 = vmul.f32 %v120, %v120
      %v153 = vmul.f32 %v121, %v121
      %v154 = vmul.f32 %v122, %v122
      %v155 = vmul.f32 %v123, %v123
      %v156 = vmul.f32 %v124, %v124
      %v157 = vmul.f32 %v125, %v125
      %v158 = vmul.f32 %v126, %v126
      %v159 = vmul.f32 %v127, %v127
      %v160 = vmul.f32 %v128, %v128
      %v161 = vmul.f32 %v129, %v129
      %v162 = vmul.f32 %v130, %v130
      %v163 = vmul.f32 %v131, %v131
      %v164 = vmul.f32 %v132, %v132
      %v165 = vmul.f32 %v133, %v133
      %v166 = vmul.f32 %v134, %v134
      %v167 = vmul.f32 %v135, %v135
      %v168 = vmul.f32 %v136, %v136
      %v169 = vmul.f32 %v137, %v137
      %v170 = vmul.f32 %v138, %v138
      %v171 = vmul.f32 %v139, %v139
      %v172 = vmul.f32 %v140, %v140
      %v173 = vmul.f32 %v141, %v141
      %v174 = vmul.f32 %v142, %v142
      %v175 = vmul.f32 %v143, %v143
      %v176 = vmul.f32 %v144, %v144
      %v177 = vmul.f32 %v145, %v145
      %v178 = vmul.f32 %v146, %v146
      %v179 = vmul.f32 %v147, %v147
      %v180 = vmul.f32 %v148, %v148
      %v181 = vmul.f32 %v149, %v149
      %v182 = vmul.f32 %v150, %v150
      %v183 = vmul.f32 %v151, %v151
      %vm184 = vcmask 523264
      %v185 = vsel %vm184, %v152, 0.0
      %186 = vadd.xlane.f32.xlu0 %v185
      %v187 = vpop.xlane.xlu0 %186
      %v188 = vsel %vm184, %v153, 0.0
      %189 = vadd.xlane.f32.xlu0 %v188
      %v190 = vpop.xlane.xlu0 %189
      %v191 = vsel %vm184, %v154, 0.0
      %192 = vadd.xlane.f32.xlu0 %v191
      %v193 = vpop.xlane.xlu0 %192
      %v194 = vsel %vm184, %v155, 0.0
      %195 = vadd.xlane.f32.xlu0 %v194
      %v196 = vpop.xlane.xlu0 %195
      %v197 = vsel %vm184, %v156, 0.0
      %198 = vadd.xlane.f32.xlu0 %v197
      %v199 = vpop.xlane.xlu0 %198
      %v200 = vsel %vm184, %v157, 0.0
      %201 = vadd.xlane.f32.xlu0 %v200
      %v202 = vpop.xlane.xlu0 %201
      %v203 = vsel %vm184, %v158, 0.0
      %204 = vadd.xlane.f32.xlu0 %v203
      %v205 = vpop.xlane.xlu0 %204
      %v206 = vsel %vm184, %v159, 0.0
      %207 = vadd.xlane.f32.xlu0 %v206
      %v208 = vpop.xlane.xlu0 %207
      %v209 = vsel %vm184, %v160, 0.0
      %210 = vadd.xlane.f32.xlu0 %v209
      %v211 = vpop.xlane.xlu0 %210
      %v212 = vsel %vm184, %v161, 0.0
      %213 = vadd.xlane.f32.xlu0 %v212
      %v214 = vpop.xlane.xlu0 %213
      %v215 = vsel %vm184, %v162, 0.0
      %216 = vadd.xlane.f32.xlu0 %v215
      %v217 = vpop.xlane.xlu0 %216
      %v218 = vsel %vm184, %v163, 0.0
      %219 = vadd.xlane.f32.xlu0 %v218
      %v220 = vpop.xlane.xlu0 %219
      %v221 = vsel %vm184, %v164, 0.0
      %222 = vadd.xlane.f32.xlu0 %v221
      %v223 = vpop.xlane.xlu0 %222
      %v224 = vsel %vm184, %v165, 0.0
      %225 = vadd.xlane.f32.xlu0 %v224
      %v226 = vpop.xlane.xlu0 %225
      %v227 = vsel %vm184, %v166, 0.0
      %228 = vadd.xlane.f32.xlu0 %v227
      %v229 = vpop.xlane.xlu0 %228
      %v230 = vsel %vm184, %v167, 0.0
      %231 = vadd.xlane.f32.xlu0 %v230
      %v232 = vpop.xlane.xlu0 %231
      %v233 = vsel %vm184, %v168, 0.0
      %234 = vadd.xlane.f32.xlu0 %v233
      %v235 = vpop.xlane.xlu0 %234
      %v236 = vsel %vm184, %v169, 0.0
      %237 = vadd.xlane.f32.xlu0 %v236
      %v238 = vpop.xlane.xlu0 %237
      %v239 = vsel %vm184, %v170, 0.0
      %240 = vadd.xlane.f32.xlu0 %v239
      %v241 = vpop.xlane.xlu0 %240
      %v242 = vsel %vm184, %v171, 0.0
      %243 = vadd.xlane.f32.xlu0 %v242
      %v244 = vpop.xlane.xlu0 %243
      %v245 = vsel %vm184, %v172, 0.0
      %246 = vadd.xlane.f32.xlu0 %v245
      %v247 = vpop.xlane.xlu0 %246
      %v248 = vsel %vm184, %v173, 0.0
      %249 = vadd.xlane.f32.xlu0 %v248
      %v250 = vpop.xlane.xlu0 %249
      %v251 = vsel %vm184, %v174, 0.0
      %252 = vadd.xlane.f32.xlu0 %v251
      %v253 = vpop.xlane.xlu0 %252
      %v254 = vsel %vm184, %v175, 0.0
      %255 = vadd.xlane.f32.xlu0 %v254
      %v256 = vpop.xlane.xlu0 %255
      %v257 = vsel %vm184, %v176, 0.0
      %258 = vadd.xlane.f32.xlu0 %v257
      %v259 = vpop.xlane.xlu0 %258
      %v260 = vsel %vm184, %v177, 0.0
      %261 = vadd.xlane.f32.xlu0 %v260
      %v262 = vpop.xlane.xlu0 %261
      %v263 = vsel %vm184, %v178, 0.0
      %264 = vadd.xlane.f32.xlu0 %v263
      %v265 = vpop.xlane.xlu0 %264
      %v266 = vsel %vm184, %v179, 0.0
      %267 = vadd.xlane.f32.xlu0 %v266
      %v268 = vpop.xlane.xlu0 %267
      %v269 = vsel %vm184, %v180, 0.0
      %270 = vadd.xlane.f32.xlu0 %v269
      %v271 = vpop.xlane.xlu0 %270
      %v272 = vsel %vm184, %v181, 0.0
      %273 = vadd.xlane.f32.xlu0 %v272
      %v274 = vpop.xlane.xlu0 %273
      %v275 = vsel %vm184, %v182, 0.0
      %276 = vadd.xlane.f32.xlu0 %v275
      %v277 = vpop.xlane.xlu0 %276
      %v278 = vsel %vm184, %v183, 0.0
      %279 = vadd.xlane.f32.xlu0 %v278
      %v280 = vpop.xlane.xlu0 %279
      %v281 = vmax.f32 %v187, 1e-24
      %v282 = vmax.f32 %v190, 1e-24
      %v283 = vmax.f32 %v193, 1e-24
      %v284 = vmax.f32 %v196, 1e-24
      %v285 = vmax.f32 %v199, 1e-24
      %v286 = vmax.f32 %v202, 1e-24
      %v287 = vmax.f32 %v205, 1e-24
      %v288 = vmax.f32 %v208, 1e-24
      %v289 = vmax.f32 %v211, 1e-24
      %v290 = vmax.f32 %v214, 1e-24
      %v291 = vmax.f32 %v217, 1e-24
      %v292 = vmax.f32 %v220, 1e-24
      %v293 = vmax.f32 %v223, 1e-24
      %v294 = vmax.f32 %v226, 1e-24
      %v295 = vmax.f32 %v229, 1e-24
      %v296 = vmax.f32 %v232, 1e-24
      %v297 = vmax.f32 %v235, 1e-24
      %v298 = vmax.f32 %v238, 1e-24
      %v299 = vmax.f32 %v241, 1e-24
      %v300 = vmax.f32 %v244, 1e-24
      %v301 = vmax.f32 %v247, 1e-24
      %v302 = vmax.f32 %v250, 1e-24
      %v303 = vmax.f32 %v253, 1e-24
      %v304 = vmax.f32 %v256, 1e-24
      %v305 = vmax.f32 %v259, 1e-24
      %v306 = vmax.f32 %v262, 1e-24
      %v307 = vmax.f32 %v265, 1e-24
      %v308 = vmax.f32 %v268, 1e-24
      %v309 = vmax.f32 %v271, 1e-24
      %v310 = vmax.f32 %v274, 1e-24
      %v311 = vmax.f32 %v277, 1e-24
      %v312 = vmax.f32 %v280, 1e-24
      %v313 = vrsqrt.pop %v281
      %v314 = vrsqrt.pop %v282
      %v315 = vrsqrt.pop %v283
      %v316 = vrsqrt.pop %v284
      %v317 = vrsqrt.pop %v285
      %v318 = vrsqrt.pop %v286
      %v319 = vrsqrt.pop %v287
      %v320 = vrsqrt.pop %v288
      %v321 = vrsqrt.pop %v289
      %v322 = vrsqrt.pop %v290
      %v323 = vrsqrt.pop %v291
      %v324 = vrsqrt.pop %v292
      %v325 = vrsqrt.pop %v293
      %v326 = vrsqrt.pop %v294
      %v327 = vrsqrt.pop %v295
      %v328 = vrsqrt.pop %v296
      %v329 = vrsqrt.pop %v297
      %v330 = vrsqrt.pop %v298
      %v331 = vrsqrt.pop %v299
      %v332 = vrsqrt.pop %v300
      %v333 = vrsqrt.pop %v301
      %v334 = vrsqrt.pop %v302
      %v335 = vrsqrt.pop %v303
      %v336 = vrsqrt.pop %v304
      %v337 = vrsqrt.pop %v305
      %v338 = vrsqrt.pop %v306
      %v339 = vrsqrt.pop %v307
      %v340 = vrsqrt.pop %v308
      %v341 = vrsqrt.pop %v309
      %v342 = vrsqrt.pop %v310
      %v343 = vrsqrt.pop %v311
      %v344 = vrsqrt.pop %v312
      %v345 = vmul.f32 %v120, %v313
      %v346 = vmul.f32 %v121, %v314
      %v347 = vmul.f32 %v122, %v315
      %v348 = vmul.f32 %v123, %v316
      %v349 = vmul.f32 %v124, %v317
      %v350 = vmul.f32 %v125, %v318
      %v351 = vmul.f32 %v126, %v319
      %v352 = vmul.f32 %v127, %v320
      %v353 = vmul.f32 %v128, %v321
      %v354 = vmul.f32 %v129, %v322
      %v355 = vmul.f32 %v130, %v323
      %v356 = vmul.f32 %v131, %v324
      %v357 = vmul.f32 %v132, %v325
      %v358 = vmul.f32 %v133, %v326
      %v359 = vmul.f32 %v134, %v327
      %v360 = vmul.f32 %v135, %v328
      %v361 = vmul.f32 %v136, %v329
      %v362 = vmul.f32 %v137, %v330
      %v363 = vmul.f32 %v138, %v331
      %v364 = vmul.f32 %v139, %v332
      %v365 = vmul.f32 %v140, %v333
      %v366 = vmul.f32 %v141, %v334
      %v367 = vmul.f32 %v142, %v335
      %v368 = vmul.f32 %v143, %v336
      %v369 = vmul.f32 %v144, %v337
      %v370 = vmul.f32 %v145, %v338
      %v371 = vmul.f32 %v146, %v339
      %v372 = vmul.f32 %v147, %v340
      %v373 = vmul.f32 %v148, %v341
      %v374 = vmul.f32 %v149, %v342
      %v375 = vmul.f32 %v150, %v343
      %v376 = vmul.f32 %v151, %v344
      %v377 = vpack.c.bf16 %v346, %v345
      %v378 = vpack.c.bf16 %v348, %v347
      %v379 = vpack.c.bf16 %v350, %v349
      %v380 = vpack.c.bf16 %v352, %v351
      %v381 = vpack.c.bf16 %v354, %v353
      %v382 = vpack.c.bf16 %v356, %v355
      %v383 = vpack.c.bf16 %v358, %v357
      %v384 = vpack.c.bf16 %v360, %v359
      %v385 = vpack.c.bf16 %v362, %v361
      %v386 = vpack.c.bf16 %v364, %v363
      %v387 = vpack.c.bf16 %v366, %v365
      %v388 = vpack.c.bf16 %v368, %v367
      %v389 = vpack.c.bf16 %v370, %v369
      %v390 = vpack.c.bf16 %v372, %v371
      %v391 = vpack.c.bf16 %v374, %v373
      %v392 = vpack.c.bf16 %v376, %v375
      %v409 = vunpack.c.l.b16 %v377
      %v410 = vunpack.c.h.b16 %v377
      %v411 = vunpack.c.l.b16 %v378
      %v412 = vunpack.c.h.b16 %v378
      %v413 = vunpack.c.l.b16 %v379
      %v414 = vunpack.c.h.b16 %v379
      %v415 = vunpack.c.l.b16 %v380
      %v416 = vunpack.c.h.b16 %v380
      %v417 = vunpack.c.l.b16 %v381
      %v418 = vunpack.c.h.b16 %v381
      %v419 = vunpack.c.l.b16 %v382
      %v420 = vunpack.c.h.b16 %v382
      %v421 = vunpack.c.l.b16 %v383
      %v422 = vunpack.c.h.b16 %v383
      %v423 = vunpack.c.l.b16 %v384
      %v424 = vunpack.c.h.b16 %v384
      %v425 = vunpack.c.l.b16 %v385
      %v426 = vunpack.c.h.b16 %v385
      %v427 = vunpack.c.l.b16 %v386
      %v428 = vunpack.c.h.b16 %v386
      %v429 = vunpack.c.l.b16 %v387
      %v430 = vunpack.c.h.b16 %v387
      %v431 = vunpack.c.l.b16 %v388
      %v432 = vunpack.c.h.b16 %v388
      %v433 = vunpack.c.l.b16 %v389
      %v434 = vunpack.c.h.b16 %v389
      %v435 = vunpack.c.l.b16 %v390
      %v436 = vunpack.c.h.b16 %v390
      %v437 = vunpack.c.l.b16 %v391
      %v438 = vunpack.c.h.b16 %v391
      %v439 = vunpack.c.l.b16 %v392
      %v440 = vunpack.c.h.b16 %v392
      %v441 = vpack.c.b16 %v409, %v409
      %v442 = vpack.c.b16 %v410, %v410
      %v443 = vpack.c.b16 %v411, %v411
      %v444 = vpack.c.b16 %v412, %v412
      %v445 = vpack.c.b16 %v413, %v413
      %v446 = vpack.c.b16 %v414, %v414
      %v447 = vpack.c.b16 %v415, %v415
      %v448 = vpack.c.b16 %v416, %v416
      %v449 = vpack.c.b16 %v417, %v417
      %v450 = vpack.c.b16 %v418, %v418
      %v451 = vpack.c.b16 %v419, %v419
      %v452 = vpack.c.b16 %v420, %v420
      %v453 = vpack.c.b16 %v421, %v421
      %v454 = vpack.c.b16 %v422, %v422
      %v455 = vpack.c.b16 %v423, %v423
      %v456 = vpack.c.b16 %v424, %v424
      %v457 = vpack.c.b16 %v425, %v425
      %v458 = vpack.c.b16 %v426, %v426
      %v459 = vpack.c.b16 %v427, %v427
      %v460 = vpack.c.b16 %v428, %v428
      %v461 = vpack.c.b16 %v429, %v429
      %v462 = vpack.c.b16 %v430, %v430
      %v463 = vpack.c.b16 %v431, %v431
      %v464 = vpack.c.b16 %v432, %v432
      %v465 = vpack.c.b16 %v433, %v433
      %v466 = vpack.c.b16 %v434, %v434
      %v467 = vpack.c.b16 %v435, %v435
      %v468 = vpack.c.b16 %v436, %v436
      %v469 = vpack.c.b16 %v437, %v437
      %v470 = vpack.c.b16 %v438, %v438
      %v471 = vpack.c.b16 %v439, %v439
      %v472 = vpack.c.b16 %v440, %v440
      %vm505 = vcmask 519168
      %506 = vst.msk [vmem:[%s118] sm:$0xf] %vm505, %v441
      %507 = vst.msk [vmem:[%s118 + $0x4] sm:$0xf] %vm505, %v442
      %508 = vst.msk [vmem:[%s118 + $0x8] sm:$0xf] %vm505, %v443
      %509 = vst.msk [vmem:[%s118 + $0xc] sm:$0xf] %vm505, %v444
      %510 = vst.msk [vmem:[%s118 + $0x10] sm:$0xf] %vm505, %v445
      %511 = vst.msk [vmem:[%s118 + $0x14] sm:$0xf] %vm505, %v446
      %512 = vst.msk [vmem:[%s118 + $0x18] sm:$0xf] %vm505, %v447
      %513 = vst.msk [vmem:[%s118 + $0x1c] sm:$0xf] %vm505, %v448
      %514 = vst.msk [vmem:[%s118 + $0x20] sm:$0xf] %vm505, %v449
      %515 = vst.msk [vmem:[%s118 + $0x24] sm:$0xf] %vm505, %v450
      %516 = vst.msk [vmem:[%s118 + $0x28] sm:$0xf] %vm505, %v451
      %517 = vst.msk [vmem:[%s118 + $0x2c] sm:$0xf] %vm505, %v452
      %518 = vst.msk [vmem:[%s118 + $0x30] sm:$0xf] %vm505, %v453
      %519 = vst.msk [vmem:[%s118 + $0x34] sm:$0xf] %vm505, %v454
      %520 = vst.msk [vmem:[%s118 + $0x38] sm:$0xf] %vm505, %v455
      %521 = vst.msk [vmem:[%s118 + $0x3c] sm:$0xf] %vm505, %v456
      %522 = vst.msk [vmem:[%s118 + $0x40] sm:$0xf] %vm505, %v457
      %523 = vst.msk [vmem:[%s118 + $0x44] sm:$0xf] %vm505, %v458
      %524 = vst.msk [vmem:[%s118 + $0x48] sm:$0xf] %vm505, %v459
      %525 = vst.msk [vmem:[%s118 + $0x4c] sm:$0xf] %vm505, %v460
      %526 = vst.msk [vmem:[%s118 + $0x50] sm:$0xf] %vm505, %v461
      %527 = vst.msk [vmem:[%s118 + $0x54] sm:$0xf] %vm505, %v462
      %528 = vst.msk [vmem:[%s118 + $0x58] sm:$0xf] %vm505, %v463
      %529 = vst.msk [vmem:[%s118 + $0x5c] sm:$0xf] %vm505, %v464
      %530 = vst.msk [vmem:[%s118 + $0x60] sm:$0xf] %vm505, %v465
      %531 = vst.msk [vmem:[%s118 + $0x64] sm:$0xf] %vm505, %v466
      %532 = vst.msk [vmem:[%s118 + $0x68] sm:$0xf] %vm505, %v467
      %533 = vst.msk [vmem:[%s118 + $0x6c] sm:$0xf] %vm505, %v468
      %534 = vst.msk [vmem:[%s118 + $0x70] sm:$0xf] %vm505, %v469
      %535 = vst.msk [vmem:[%s118 + $0x74] sm:$0xf] %vm505, %v470
      %536 = vst.msk [vmem:[%s118 + $0x78] sm:$0xf] %vm505, %v471
      %537 = vst.msk [vmem:[%s118 + $0x7c] sm:$0xf] %vm505, %v472
      %s538 = smul.u32 32, %s12
      %p539 = scmp.lt.s32.totalorder %s538, 63
      %s540 = scalar_select %p539, %s538, 63
      %s541 = smul.addr %s540, 4
      %s542 = scalar_lea.vmem %s1, %s541
      // Predicated region
      $region25: #{tpu_custom_call.1} parent=23 // pred_check
        %p543 = pneg %p56
      $region26: #{tpu_custom_call.1} parent=23 // pred_check_branch
        %545 = sbr.rel (%p543) target = $region28
      $region27: #{tpu_custom_call.1} parent=23 // pred_region
        %s546 = smul.u32 32, %s12
      $region28: #{tpu_custom_call.1} parent=23 // pred_fallthru
        _
    $region24: #{tpu_custom_call.1} parent=5 // pred_fallthru
      _
    %p547 = scmp.le.s32.totalorder 2, %s7
    // Predicated region
    $region29: #{tpu_custom_call.1} parent=5 // pred_check
      %p548 = pneg %p547
    $region30: #{tpu_custom_call.1} parent=5 // pred_check_branch
      %550 = sbr.rel (%p548) target = $region32
    $region31: #{tpu_custom_call.1} parent=5 // pred_region
      %s551 = ssub.s32 %s7, 2
      // Predicated region
      $region33: #{tpu_custom_call.1} parent=31 // pred_check
        %p552 = pneg %p62
      $region34: #{tpu_custom_call.1} parent=31 // pred_check_branch
        %554 = sbr.rel (%p552) target = $region36
      $region35: #{tpu_custom_call.1} parent=31 // pred_region
        %s555 = smul.u32 32, %s13
        %p556 = scmp.lt.s32.totalorder %s555, 63
        %s557 = scalar_select %p556, %s555, 63
        %s558 = smul.addr %s557, 4
        %s559 = scalar_lea.vmem %s1, %s558
      $region36: #{tpu_custom_call.1} parent=31 // pred_fallthru
        _
    $region32: #{tpu_custom_call.1} parent=5 // pred_fallthru
      _
  $region6: #{tpu_custom_call.1} parent=0 // loop_footer
    %s11 = sadd.s32 1, %s7
  $region7: #{tpu_custom_call.1} parent=0 // loop_footer_branch
    %6 = sbr.rel target = $region3
  $region8: #{tpu_custom_call.1} parent=0 // loop_exit
    _

</llo_original>
